<compile_context>
chip_gen: v7x
topology: tpu7x:2x2x1
jax: 0.10.0
libtpu: 0.0.40
codegen_flags: <defaults>
</compile_context>

<pallas_src>
import jax
import jax.numpy as jnp
from jax.experimental import pallas as pl
from jax.experimental.pallas import tpu as pltpu

LANES = 128


def _round_up(n, m):
    return ((n + m - 1) // m) * m


def _plain_kernel(x_ref, w_ref, b_ref, o_ref):
    # x: (TB, D) VMEM   w: (1, D) VMEM   b: (1,) SMEM   o: (TB, 1) VMEM
    x = x_ref[...].astype(jnp.float32)
    w = w_ref[...].astype(jnp.float32)               # sublane-broadcast row
    acc = jnp.sum(x * w, axis=-1, keepdims=True)      # VPU mul + XLU lane reduce
    o_ref[...] = (acc + b_ref[0]).astype(o_ref.dtype)


def _packed_kernel(x_ref, w_ref, s_ref, b_ref, o_ref):
    # x: (TB, P*D) VMEM  (P original rows packed along the 128 lanes)
    # w: (1, P*D) VMEM   (weight row tiled P times)
    # s: (P*D, P) VMEM   (0/1 segment selector)
    # b: (1,) SMEM       o: (TB, P) VMEM
    x = x_ref[...].astype(jnp.float32)
    w = w_ref[...].astype(jnp.float32)
    prod = x * w                                      # VPU, full lane utilization
    # Segmented lane reduction via a tiny matmul on the otherwise-idle MXU;
    # avoids an in-kernel (TB, P, D) reshape/relayout.
    acc = jnp.dot(prod, s_ref[...], preferred_element_type=jnp.float32)  # (TB, P)
    o_ref[...] = (acc + b_ref[0]).astype(o_ref.dtype)


def _vmem_plan():
    """Return (vmem_limit_bytes, x_tile_target_bytes) for this generation."""
    cap = None
    try:
        cap = getattr(pltpu.get_tpu_info(), "vmem_capacity_bytes", None)
    except Exception:
        cap = None
    if cap is None:
        cap = 64 * 1024 * 1024                       # conservative default
    if cap >= 100 * 1024 * 1024:                     # v5e / v6e: 128 MiB VMEM
        return 100 * 1024 * 1024, 8 * 1024 * 1024
    return 48 * 1024 * 1024, 8 * 1024 * 1024         # v7x-class: 64 MiB VMEM


def logistic_regression_forward(x, w, b, *, block_rows=None):
    """x: (B, D), w: (1, D) (PyTorch Linear layout), b: (1,)  ->  (B, 1)."""
    B, D = x.shape
    assert w.shape == (1, D) and b.shape == (1,)
    itemsize = jnp.dtype(x.dtype).itemsize
    vmem_limit, tile_target = _vmem_plan()

    # Lane-packing factor: pack P rows per 128-lane row when D divides 128.
    pack = 1
    if D < LANES and LANES % D == 0:
        p = LANES // D
        while p >= 2 and B % p != 0:
            p //= 2
        if p >= 2:
            pack = p

    if pack > 1:
        num_rows, width = B // pack, pack * D
        x_in = x.reshape(num_rows, width)             # contiguous, zero-copy
        w_in = jnp.tile(w, (1, pack))                 # (1, P*D)
        sel = (jnp.arange(width)[:, None] // D
               == jnp.arange(pack)[None, :]).astype(jnp.float32)
    else:
        num_rows, width = B, D
        x_in, w_in, sel = x, w, None

    # Byte-based tile sizing (multiple of 8 rows), capped by the VMEM budget.
    row_bytes = width * itemsize
    cap_rows = max(8, ((vmem_limit // 4) // row_bytes) // 8 * 8)
    if block_rows is None:
        tb = max(8, (tile_target // row_bytes) // 8 * 8)
        if num_rows * row_bytes >= (1 << 20):
            # keep >= 4 grid steps so v7x's 2 TensorCores both get work
            tb = min(tb, _round_up(pl.cdiv(num_rows, 4), 8))
    else:
        tb = max(8, _round_up(block_rows, 8))
    tb = min(tb, cap_rows, _round_up(num_rows, 8))
    grid = (pl.cdiv(num_rows, tb),)

    cost = pl.CostEstimate(
        flops=2 * B * D,
        transcendentals=0,
        bytes_accessed=B * D * itemsize + B * itemsize + D * 4 + 4,
    )
    cparams = pltpu.CompilerParams(
        dimension_semantics=("parallel",),            # v7x: shard over its 2 TCs
        vmem_limit_bytes=vmem_limit,
    )

    if pack > 1:
        y = pl.pallas_call(
            _packed_kernel,
            out_shape=jax.ShapeDtypeStruct((num_rows, pack), x.dtype),
            grid=grid,
            in_specs=[
                pl.BlockSpec((tb, width), lambda i: (i, 0)),            # x tiles
                pl.BlockSpec((1, width), lambda i: (0, 0)),             # tiled w
                pl.BlockSpec((width, pack), lambda i: (0, 0)),          # selector
                pl.BlockSpec(memory_space=pltpu.MemorySpace.SMEM),      # bias
            ],
            out_specs=pl.BlockSpec((tb, pack), lambda i: (i, 0)),
            compiler_params=cparams,
            cost_estimate=cost,
        )(x_in, w_in, sel, b)
        return y.reshape(B, 1)

    y = pl.pallas_call(
        _plain_kernel,
        out_shape=jax.ShapeDtypeStruct((B, 1), x.dtype),
        grid=grid,
        in_specs=[
            pl.BlockSpec((tb, D), lambda i: (i, 0)),                    # x tiles
            pl.BlockSpec((1, D), lambda i: (0, 0)),                     # weights
            pl.BlockSpec(memory_space=pltpu.MemorySpace.SMEM),          # bias
        ],
        out_specs=pl.BlockSpec((tb, 1), lambda i: (i, 0)),
        compiler_params=cparams,
        cost_estimate=cost,
    )(x, w, b)
    return y


if __name__ == "__main__":
    key = jax.random.PRNGKey(0)
    kx, kw, kb = jax.random.split(key, 3)

    # (B, D, block_rows): exercise packed path with even/ragged tiles, the
    # plain fallback path (B or D breaking the packing preconditions), and
    # the default byte-derived tile sizing.
    cases = [
        (256, 32, 24),    # packed (P=4), multi-step grid
        (200, 32, 16),    # packed (P=4), ragged last tile
        (201, 32, 64),    # fallback plain path (odd B), ragged last tile
        (64, 48, None),   # fallback plain path (128 % D != 0), derived tile
    ]

    for B, D, brows in cases:
        bound = 1.0 / (D ** 0.5)
        w = jax.random.uniform(jax.random.fold_in(kw, D), (1, D), jnp.float32,
                               -bound, bound)
        b = jax.random.uniform(jax.random.fold_in(kb, D), (1,), jnp.float32,
                               -bound, bound)
        x = jax.random.normal(jax.random.fold_in(kx, B * 1000 + D), (B, D),
                              dtype=jnp.float32)

        y = logistic_regression_forward(x, w, b, block_rows=brows)
        jax.block_until_ready(y)

        y_ref = x @ w.T + b            # same semantics as torch Linear forward
        assert y.shape == (B, 1)
        assert jnp.allclose(y, y_ref, atol=1e-5, rtol=1e-5), (
            "max abs err:", float(jnp.max(jnp.abs(y - y_ref))))

    print("KERNEL_OK")
</pallas_src>

<mosaic_0001>
module attributes {stable_mosaic.version = 11 : i64} {
  func.func @_packed_kernel(%arg0: i32, %arg1: memref<24x128xf32, #tpu.memory_space<vmem>>, %arg2: memref<1x128xf32, #tpu.memory_space<vmem>>, %arg3: memref<128x4xf32, #tpu.memory_space<vmem>>, %arg4: memref<1xf32, #tpu.memory_space<smem>>, %arg5: memref<24x4xf32, #tpu.memory_space<vmem>>) attributes {dimension_semantics = [#tpu.dimension_semantics<parallel>], iteration_bounds = array<i64: 3>, scalar_prefetch = 0 : i64, scratch_operands = 0 : i64, tpu.core_type = #tpu.core_type<tc>, window_params = [{transform_indices = @transform_0, window_bounds = array<i64: 24, 128>}, {pipeline_mode = #tpu.pipeline_mode<synchronous>, transform_indices = @transform_1, window_bounds = array<i64: 1, 128>}, {pipeline_mode = #tpu.pipeline_mode<synchronous>, transform_indices = @transform_2, window_bounds = array<i64: 128, 4>}, {transform_indices = @transform_3, window_bounds = array<i64: 1>}, {transform_indices = @transform_4, window_bounds = array<i64: 24, 4>}]} {
    %c0 = arith.constant 0 : index
    %c0_0 = arith.constant 0 : index
    %0 = vector.load %arg1[%c0, %c0_0] : memref<24x128xf32, #tpu.memory_space<vmem>>, vector<24x128xf32>
    %c0_1 = arith.constant 0 : index
    %c0_2 = arith.constant 0 : index
    %1 = vector.load %arg2[%c0_1, %c0_2] : memref<1x128xf32, #tpu.memory_space<vmem>>, vector<1x128xf32>
    %2 = vector.broadcast %1 : vector<1x128xf32> to vector<24x128xf32>
    %3 = arith.mulf %0, %2 : vector<24x128xf32>
    %c0_3 = arith.constant 0 : index
    %c0_4 = arith.constant 0 : index
    %4 = vector.load %arg3[%c0_3, %c0_4] : memref<128x4xf32, #tpu.memory_space<vmem>>, vector<128x4xf32>
    %cst = arith.constant dense<0.000000e+00> : vector<24x4xf32>
    %5 = tpu.matmul %3, %4, %cst {dimension_numbers = #tpu.dot_dimension_numbers<[1], [0], [0], [1], [0, 0, 1, 1], [], []>} : vector<24x128xf32>, vector<128x4xf32>, vector<24x4xf32> -> vector<24x4xf32>
    %c0_5 = arith.constant 0 : index
    %6 = memref.load %arg4[%c0_5] : memref<1xf32, #tpu.memory_space<smem>>
    %7 = vector.broadcast %6 : f32 to vector<24x4xf32>
    %8 = arith.addf %5, %7 : vector<24x4xf32>
    %c0_6 = arith.constant 0 : index
    %c0_7 = arith.constant 0 : index
    %9 = vector.load %arg5[%c0_6, %c0_7] : memref<24x4xf32, #tpu.memory_space<vmem>>, vector<24x4xf32>
    tpu.vector_store %arg5[%c0_6, %c0_7], %8 {strides = array<i32>} : memref<24x4xf32, #tpu.memory_space<vmem>>, vector<24x4xf32>,
    return
  }
  func.func @transform_0(%arg0: i32) -> (i32, i32) {
    %c0_i32 = arith.constant 0 : i32
    %c0_i32_0 = arith.constant 0 : i32
    return %arg0, %c0_i32 : i32, i32
  }
  func.func @transform_1(%arg0: i32) -> (i32, i32) {
    %c0_i32 = arith.constant 0 : i32
    %c0_i32_0 = arith.constant 0 : i32
    %c0_i32_1 = arith.constant 0 : i32
    return %c0_i32, %c0_i32_0 : i32, i32
  }
  func.func @transform_2(%arg0: i32) -> (i32, i32) {
    %c0_i32 = arith.constant 0 : i32
    %c0_i32_0 = arith.constant 0 : i32
    %c0_i32_1 = arith.constant 0 : i32
    return %c0_i32, %c0_i32_0 : i32, i32
  }
  func.func @transform_3(%arg0: i32) -> i32 {
    %c0_i32 = arith.constant 0 : i32
    %c0_i32_0 = arith.constant 0 : i32
    return %c0_i32 : i32
  }
  func.func @transform_4(%arg0: i32) -> (i32, i32) {
    %c0_i32 = arith.constant 0 : i32
    %c0_i32_0 = arith.constant 0 : i32
    return %arg0, %c0_i32 : i32, i32
  }
}

</mosaic_0001>

<llo_original>
// kernel: tpu_custom_call.1
$region0: #{tpu_custom_call.1}
  #allocation0 [shape = 'u32[]', space=smem, size = 0x4, offset = 0x4, fixed_abs, tag = 'smem constant byte address 0x4 - core index']
  #allocation1 [shape = 'u32[144,128]{1,0:T(1,128)}', space=vmem, size = 0x12000, scoped, tag = 'internal scratch']
  #allocation2 [shape = 'f32[1]{0:T(128)S(6)}', space=smem, size = 0x200, scoped, tag = 'scoped memory for tpu_custom_call.1']
  %s0 = inlined_call_operand.vmem [shape: f32[64,128], index: 0, kind: input, shape index: {}]
  %s1 = inlined_call_operand.vmem [shape: f32[1,128], index: 1, kind: input, shape index: {}]
  %s2 = inlined_call_operand.vmem [shape: f32[128,4], index: 2, kind: input, shape index: {}]
  %s3 = inlined_call_operand.<no memory space> [shape: f32[1], index: 3, kind: input, shape index: {}]
  %s4 = inlined_call_operand.vmem [shape: f32[64,4], index: 4, kind: output, shape index: {}]
  %s5 = sld [smem:[#allocation0]]
  $region97: #{tpu_custom_call.1} parent=0
    _
  %s7 = ssub.s32 1, %s5
  %s8 = scalar_select 0, %s7, %s5
  %9 = sst [smem:[#allocation2]] %s3
  $region1: #{tpu_custom_call.1} parent=0
    #allocation3 [shape = 'u8[24576]{0}', space=vmem, size = 0x6000, scoped, tag = 'output window, operand 0']
    loop: start=0, step=1, limit=5
    $region2: #{tpu_custom_call.1} parent=1 // loop_pre_header
      _
    $region3: #{tpu_custom_call.1} parent=1 // loop_header
      %s11 = sphi 0, %s15
      %p12 = scmp.ge.s32.totalorder %s11, 5
      %s21 = sphi 0, %s23
      %s24 = sphi 0, %s21
      %s25 = sphi 0, %s24
      %s41 = sphi 0, %s25
      %s45 = sphi 0, %s45
      %s47 = sphi 0, %s45
      %s48 = sphi 0, %s47
      %s62 = sphi 0, %s48
      %s66 = sphi 0, %s66
      %s68 = sphi 0, %s66
      %s69 = sphi 0, %s68
      %s83 = sphi 0, %s69
      %s87 = sphi 0, %s87
      %s89 = sphi 0, %s87
      %s90 = sphi 0, %s89
      %s104 = sphi 0, %s90
      %s110 = sphi 0, %s112
      %s113 = sphi 0, %s110
      %s114 = sphi 0, %s113
      %s130 = sphi 0, %s114
    $region4: #{tpu_custom_call.1} parent=1 // loop_header_branch
      %14 = sbr.rel (%p12) target = $region8
    $region5: #{tpu_custom_call.1} parent=1 // loop_body
      %s16 = ssub.s32 %s11, 1
      %s17 = ssub.s32 %s11, 2
      %s18 = sadd.s32 %s11, 1
      %s19 = ssub.s32 %s11, %s18
      %p20 = scmp.eq.s32.totalorder %s19, 0
      %s22 = sadd.s32 %s21, 1
      %s23 = scalar_select %p20, %s21, %s22
      %p26 = pneg %p20
      %p27 = scmp.eq.s32.totalorder %s11, 2
      %p28 = por %p26, %p27
      %p29 = scmp.ne.s32.totalorder %s21, %s24
      %p30 = scmp.eq.s32.totalorder %s11, 0
      %p31 = por %p29, %p30
      %p32 = scmp.ne.s32.totalorder %s21, %s24
      %p33 = scmp.eq.s32.totalorder %s16, 2
      %p34 = por %p32, %p33
      %p35 = scmp.ne.s32.totalorder %s24, %s25
      %p36 = scmp.eq.s32.totalorder %s16, 0
      %p37 = por %p35, %p36
      %p38 = scmp.ne.s32.totalorder %s24, %s25
      %p39 = scmp.eq.s32.totalorder %s17, 2
      %p40 = por %p38, %p39
      %p42 = scmp.ne.s32.totalorder %s25, %s41
      %p43 = scmp.eq.s32.totalorder %s17, 0
      %p44 = por %p42, %p43
      %s46 = sadd.s32 %s45, 1
      %p49 = scmp.eq.s32.totalorder %s11, 2
      %p50 = scmp.ne.s32.totalorder %s45, %s47
      %p51 = scmp.eq.s32.totalorder %s11, 0
      %p52 = por %p50, %p51
      %p53 = scmp.ne.s32.totalorder %s45, %s47
      %p54 = scmp.eq.s32.totalorder %s16, 2
      %p55 = por %p53, %p54
      %p56 = scmp.ne.s32.totalorder %s47, %s48
      %p57 = scmp.eq.s32.totalorder %s16, 0
      %p58 = por %p56, %p57
      %p59 = scmp.ne.s32.totalorder %s47, %s48
      %p60 = scmp.eq.s32.totalorder %s17, 2
      %p61 = por %p59, %p60
      %p63 = scmp.ne.s32.totalorder %s48, %s62
      %p64 = scmp.eq.s32.totalorder %s17, 0
      %p65 = por %p63, %p64
      %s67 = sadd.s32 %s66, 1
      %p70 = scmp.eq.s32.totalorder %s11, 2
      %p71 = scmp.ne.s32.totalorder %s66, %s68
      %p72 = scmp.eq.s32.totalorder %s11, 0
      %p73 = por %p71, %p72
      %p74 = scmp.ne.s32.totalorder %s66, %s68
      %p75 = scmp.eq.s32.totalorder %s16, 2
      %p76 = por %p74, %p75
      %p77 = scmp.ne.s32.totalorder %s68, %s69
      %p78 = scmp.eq.s32.totalorder %s16, 0
      %p79 = por %p77, %p78
      %p80 = scmp.ne.s32.totalorder %s68, %s69
      %p81 = scmp.eq.s32.totalorder %s17, 2
      %p82 = por %p80, %p81
      %p84 = scmp.ne.s32.totalorder %s69, %s83
      %p85 = scmp.eq.s32.totalorder %s17, 0
      %p86 = por %p84, %p85
      %s88 = sadd.s32 %s87, 1
      %p91 = scmp.eq.s32.totalorder %s11, 2
      %p92 = scmp.ne.s32.totalorder %s87, %s89
      %p93 = scmp.eq.s32.totalorder %s11, 0
      %p94 = por %p92, %p93
      %p95 = scmp.ne.s32.totalorder %s87, %s89
      %p96 = scmp.eq.s32.totalorder %s16, 2
      %p97 = por %p95, %p96
      %p98 = scmp.ne.s32.totalorder %s89, %s90
      %p99 = scmp.eq.s32.totalorder %s16, 0
      %p100 = por %p98, %p99
      %p101 = scmp.ne.s32.totalorder %s89, %s90
      %p102 = scmp.eq.s32.totalorder %s17, 2
      %p103 = por %p101, %p102
      %p105 = scmp.ne.s32.totalorder %s90, %s104
      %p106 = scmp.eq.s32.totalorder %s17, 0
      %p107 = por %p105, %p106
      %s108 = ssub.s32 %s11, %s18
      %p109 = scmp.eq.s32.totalorder %s108, 0
      %s111 = sadd.s32 %s110, 1
      %s112 = scalar_select %p109, %s110, %s111
      %p115 = pneg %p109
      %p116 = scmp.eq.s32.totalorder %s11, 2
      %p117 = por %p115, %p116
      %p118 = scmp.ne.s32.totalorder %s110, %s113
      %p119 = scmp.eq.s32.totalorder %s11, 0
      %p120 = por %p118, %p119
      %p121 = scmp.ne.s32.totalorder %s110, %s113
      %p122 = scmp.eq.s32.totalorder %s16, 2
      %p123 = por %p121, %p122
      %p124 = scmp.ne.s32.totalorder %s113, %s114
      %p125 = scmp.eq.s32.totalorder %s16, 0
      %p126 = por %p124, %p125
      %p127 = scmp.ne.s32.totalorder %s113, %s114
      %p128 = scmp.eq.s32.totalorder %s17, 2
      %p129 = por %p127, %p128
      %p131 = scmp.ne.s32.totalorder %s114, %s130
      %p132 = scmp.eq.s32.totalorder %s17, 0
      %p133 = por %p131, %p132
      %p134 = scmp.le.s32.totalorder 1, %s11
      %p135 = scmp.lt.s32.totalorder %s11, 4
      %p136 = pnand %p134, %p135
      %p137 = pneg %p136
      // Predicated region
      $region9: #{tpu_custom_call.1} parent=5 // pred_check
        _
      $region10: #{tpu_custom_call.1} parent=5 // pred_check_branch
        %139 = sbr.rel (%p136) target = $region12
      $region11: #{tpu_custom_call.1} parent=5 // pred_region
        %s140 = ssub.s32 %s11, 1
        // Predicated region
        $region13: #{tpu_custom_call.1} parent=11 // pred_check
          %p141 = pneg %p58
        $region14: #{tpu_custom_call.1} parent=11 // pred_check_branch
          %143 = sbr.rel (%p141) target = $region16
        $region15: #{tpu_custom_call.1} parent=11 // pred_region
          _
        $region16: #{tpu_custom_call.1} parent=11 // pred_fallthru
          _
        // Predicated region
        $region17: #{tpu_custom_call.1} parent=11 // pred_check
          %p144 = pneg %p79
        $region18: #{tpu_custom_call.1} parent=11 // pred_check_branch
          %146 = sbr.rel (%p144) target = $region20
        $region19: #{tpu_custom_call.1} parent=11 // pred_region
          _
        $region20: #{tpu_custom_call.1} parent=11 // pred_fallthru
          _
        // Predicated region
        $region21: #{tpu_custom_call.1} parent=11 // pred_check
          %p147 = pneg %p100
        $region22: #{tpu_custom_call.1} parent=11 // pred_check_branch
          %149 = sbr.rel (%p147) target = $region24
        $region23: #{tpu_custom_call.1} parent=11 // pred_region
          _
        $region24: #{tpu_custom_call.1} parent=11 // pred_fallthru
          _
      $region12: #{tpu_custom_call.1} parent=5 // pred_fallthru
        _
      %p150 = scmp.lt.s32.totalorder %s11, 3
      // Predicated region
      $region25: #{tpu_custom_call.1} parent=5 // pred_check
        %p151 = pneg %p150
      $region26: #{tpu_custom_call.1} parent=5 // pred_check_branch
        %153 = sbr.rel (%p151) target = $region28
      $region27: #{tpu_custom_call.1} parent=5 // pred_region
        // Predicated region
        $region29: #{tpu_custom_call.1} parent=27 // pred_check
          %p154 = pneg %p31
        $region30: #{tpu_custom_call.1} parent=27 // pred_check_branch
          %156 = sbr.rel (%p154) target = $region32
        $region31: #{tpu_custom_call.1} parent=27 // pred_region
          %s157 = smul.u32 3, %s11
          %s158 = ssub.s32 8, %s157
          %p159 = scmp.lt.s32.totalorder %s158, 3
          %s160 = scalar_select %p159, %s158, 3
          %s161 = smul.u32 128, %s160
          %p162 = scmp.lt.s32.totalorder %s157, 7
          %s163 = scalar_select %p162, %s157, 7
          %s164 = smul.addr %s163, 8
          %s165 = scalar_lea.vmem %s0, %s164
          %s166 = smul.u32 3, %s11
          %s167 = ssub.s32 8, %s166
          %p168 = scmp.lt.s32.totalorder %s167, 3
          %s169 = scalar_select %p168, %s167, 3
          %s170 = smul.u32 128, %s169
        $region32: #{tpu_custom_call.1} parent=27 // pred_fallthru
          _
      $region28: #{tpu_custom_call.1} parent=5 // pred_fallthru
        _
      %p171 = scmp.le.s32.totalorder 1, %s11
      %p172 = scmp.lt.s32.totalorder %s11, 4
      %p173 = pnand %p171, %p172
      %p174 = pneg %p173
      // Predicated region
      $region33: #{tpu_custom_call.1} parent=5 // pred_check
        _
      $region34: #{tpu_custom_call.1} parent=5 // pred_check_branch
        %176 = sbr.rel (%p173) target = $region36
      $region35: #{tpu_custom_call.1} parent=5 // pred_region
        %s177 = ssub.s32 %s11, 1
        %s178 = smul.u32 3, %s16
        %s179 = ssub.s32 8, %s178
        %p180 = scmp.lt.s32.totalorder %s179, 3
        %s181 = scalar_select %p180, %s179, 3
        %s182 = smul.u32 128, %s181
        %p183 = scmp.lt.s32.totalorder %s178, 7
        %s184 = scalar_select %p183, %s178, 7
        %s185 = smul.addr %s184, 8
        %s186 = scalar_lea.vmem %s0, %s185
        %p187 = pneg %p37
        %p188 = pneg %p34
        %p189 = pneg %p58
        %p190 = pneg %p55
        %p191 = pneg %p79
        %p192 = pneg %p76
        %p193 = pneg %p100
        %p194 = pneg %p97
        %p195 = pneg %p126
        %p196 = pneg %p123
        %s197 = sand.u32 %s113, 1
        %s198 = sand.u32 %s113, 1
        %s199 = smul.addr %s198, 24
        %s200 = scalar_lea.vmem [#allocation3], %s199
        %s201 = smul.u32 3, %s16
        %s202 = ssub.s32 8, %s201
        %p203 = scmp.lt.s32.totalorder %s202, 3
        %s204 = scalar_select %p203, %s202, 3
        %s205 = smul.u32 128, %s204
        %p206 = scmp.lt.s32.totalorder %s201, 7
        %s207 = scalar_select %p206, %s201, 7
        %s208 = smul.addr %s207, 8
        %s209 = scalar_lea.vmem %s0, %s208
        %s210 = smul.u32 3, %s16
        %s211 = ssub.s32 8, %s210
        %p212 = scmp.lt.s32.totalorder %s211, 3
        %s213 = scalar_select %p212, %s211, 3
        %s214 = smul.u32 128, %s213
        %s215 = smul.u32 3, %s16
        %s216 = ssub.s32 8, %s215
        %p217 = scmp.lt.s32.totalorder %s216, 3
        %s218 = scalar_select %p217, %s216, 3
        %s219 = smul.u32 128, %s218
        %v220 = vld [vmem:[%s209] sm:$0xff]
        %v221 = vld [vmem:[%s209 + $0x8] sm:$0xff]
        %v222 = vld [vmem:[%s209 + $0x10] sm:$0xff]
        %v223 = vld [vmem:[%s1] sm:$0x1]
        %v225 = vlaneseq
        %v226 = vshrl.u32 %v225, 7
        %v227 = vsub.s32 0, %v226
        %v228 = vrot.slane %v223, %v227
        %v230 = vmul.f32 %v220, %v228
        %v231 = vmul.f32 %v221, %v228
        %v232 = vmul.f32 %v222, %v228
        %v233 = vld [vmem:[%s2] sm:$0xff]
        %v234 = vld [vmem:[%s2 + $0x8] sm:$0xff]
        %v235 = vld [vmem:[%s2 + $0x10] sm:$0xff]
        %v236 = vld [vmem:[%s2 + $0x18] sm:$0xff]
        %v237 = vld [vmem:[%s2 + $0x20] sm:$0xff]
        %v238 = vld [vmem:[%s2 + $0x28] sm:$0xff]
        %v239 = vld [vmem:[%s2 + $0x30] sm:$0xff]
        %v240 = vld [vmem:[%s2 + $0x38] sm:$0xff]
        %v241 = vld [vmem:[%s2 + $0x40] sm:$0xff]
        %v242 = vld [vmem:[%s2 + $0x48] sm:$0xff]
        %v243 = vld [vmem:[%s2 + $0x50] sm:$0xff]
        %v244 = vld [vmem:[%s2 + $0x58] sm:$0xff]
        %v245 = vld [vmem:[%s2 + $0x60] sm:$0xff]
        %v246 = vld [vmem:[%s2 + $0x68] sm:$0xff]
        %v247 = vld [vmem:[%s2 + $0x70] sm:$0xff]
        %v248 = vld [vmem:[%s2 + $0x78] sm:$0xff]
        %s249 = sld [smem:[#allocation2]]
        %v250 = vstv %s249
        %251 = vmatprep.subr.mxu0 0.0
        %252 = vmatpush1.msra.mxu0 %v233
        %253 = vmatprep.subr.mxu0 0.0
        %254 = vmatpush1.msra.mxu0 %v234
        %255 = vmatprep.subr.mxu0 0.0
        %256 = vmatpush1.msra.mxu0 %v235
        %257 = vmatprep.subr.mxu0 0.0
        %258 = vmatpush1.msra.mxu0 %v236
        %259 = vmatprep.subr.mxu0 0.0
        %260 = vmatpush1.msra.mxu0 %v237
        %261 = vmatprep.subr.mxu0 0.0
        %262 = vmatpush1.msra.mxu0 %v238
        %263 = vmatprep.subr.mxu0 0.0
        %264 = vmatpush1.msra.mxu0 %v239
        %265 = vmatprep.subr.mxu0 0.0
        %266 = vmatpush1.msra.mxu0 %v240
        %267 = vmatprep.subr.mxu0 0.0
        %268 = vmatpush1.msra.mxu0 %v241
        %269 = vmatprep.subr.mxu0 0.0
        %270 = vmatpush1.msra.mxu0 %v242
        %271 = vmatprep.subr.mxu0 0.0
        %272 = vmatpush1.msra.mxu0 %v243
        %273 = vmatprep.subr.mxu0 0.0
        %274 = vmatpush1.msra.mxu0 %v244
        %275 = vmatprep.subr.mxu0 0.0
        %276 = vmatpush1.msra.mxu0 %v245
        %277 = vmatprep.subr.mxu0 0.0
        %278 = vmatpush1.msra.mxu0 %v246
        %279 = vmatprep.subr.mxu0 0.0
        %280 = vmatpush1.msra.mxu0 %v247
        %281 = vmatprep.subr.mxu0 0.0
        %282 = vmatpush1.msra.mxu0 %v248
        %283 = vmatprep.subr.mxu0 0.0
        %284 = vmatpush1.msra.mxu0 0.0
        %285 = vmatprep.subr.mxu0 0.0
        %286 = vmatpush1.msra.mxu0 0.0
        %287 = vmatprep.subr.mxu0 0.0
        %288 = vmatpush1.msra.mxu0 0.0
        %289 = vmatprep.subr.mxu0 0.0
        %290 = vmatpush1.msra.mxu0 0.0
        %291 = vmatprep.subr.mxu0 0.0
        %292 = vmatpush1.msra.mxu0 0.0
        %293 = vmatprep.subr.mxu0 0.0
        %294 = vmatpush1.msra.mxu0 0.0
        %295 = vmatprep.subr.mxu0 0.0
        %296 = vmatpush1.msra.mxu0 0.0
        %297 = vmatprep.subr.mxu0 0.0
        %298 = vmatpush1.msra.mxu0 0.0
        %299 = vmatprep.subr.mxu0 0.0
        %300 = vmatpush1.msra.mxu0 0.0
        %301 = vmatprep.subr.mxu0 0.0
        %302 = vmatpush1.msra.mxu0 0.0
        %303 = vmatprep.subr.mxu0 0.0
        %304 = vmatpush1.msra.mxu0 0.0
        %305 = vmatprep.subr.mxu0 0.0
        %306 = vmatpush1.msra.mxu0 0.0
        %307 = vmatprep.subr.mxu0 0.0
        %308 = vmatpush1.msra.mxu0 0.0
        %309 = vmatprep.subr.mxu0 0.0
        %310 = vmatpush1.msra.mxu0 0.0
        %311 = vmatprep.subr.mxu0 0.0
        %312 = vmatpush1.msra.mxu0 0.0
        %313 = vmatprep.subr.mxu0 0.0
        %314 = vmatpush1.msra.mxu0 0.0
        %315 = vmatprep.mubr.f32.mxu0 0.0
        %316 = vmatmul.mubr.f32.gmra.mrb[0].mxu0 %v230
        %v317 = vpop.f32.mrb[0].mxu0
        %v318 = vadd.f32 %v250, %v317
        %v319 = vpop.f32.mrb[0].mxu0
        %320 = vmatprep.mubr.f32.mxu0 0.0
        %321 = vmatmul.mubr.f32.gmra.mrb[0].mxu0 %v231
        %v322 = vpop.f32.mrb[0].mxu0
        %v323 = vadd.f32 %v250, %v322
        %v324 = vpop.f32.mrb[0].mxu0
        %325 = vmatprep.mubr.f32.mxu0 0.0
        %326 = vmatmul.mubr.f32.gmra.mrb[0].mxu0 %v232
        %v327 = vpop.f32.mrb[0].mxu0
        %v328 = vadd.f32 %v250, %v327
        %v329 = vpop.f32.mrb[0].mxu0
        %330 = vdwg.mxu0
        %vm331 = vcmask 31744
        %332 = vst.msk [vmem:[%s200] sm:$0xff] %vm331, %v318
        %333 = vst.msk [vmem:[%s200 + $0x8] sm:$0xff] %vm331, %v323
        %334 = vst.msk [vmem:[%s200 + $0x10] sm:$0xff] %vm331, %v328
        %s335 = sand.u32 %s113, 1
        %s336 = sand.u32 %s113, 1
        %s337 = smul.addr %s336, 24
        %s338 = scalar_lea.vmem [#allocation3], %s337
        // Predicated region
        $region37: #{tpu_custom_call.1} parent=35 // pred_check
          %p339 = pneg %p123
        $region38: #{tpu_custom_call.1} parent=35 // pred_check_branch
          %341 = sbr.rel (%p339) target = $region40
        $region39: #{tpu_custom_call.1} parent=35 // pred_region
          %s342 = smul.u32 3, %s16
          %s343 = ssub.s32 8, %s342
          %p344 = scmp.lt.s32.totalorder %s343, 3
          %s345 = scalar_select %p344, %s343, 3
          %s346 = smul.u32 128, %s345
          %p347 = scmp.ne.s32.totalorder 0, %s346
          %s348 = smul.addr %s342, 8
          %s349 = scalar_lea.vmem %s4, %s348
          // Predicated region
          $region41: #{tpu_custom_call.1} parent=39 // pred_check
            %p350 = pneg %p347
          $region42: #{tpu_custom_call.1} parent=39 // pred_check_branch
            %352 = sbr.rel (%p350) target = $region44
          $region43: #{tpu_custom_call.1} parent=39 // pred_region
            // Predicated region
            $region45: #{tpu_custom_call.1} parent=43 // pred_check
              _
            $region46: #{tpu_custom_call.1} parent=43 // pred_check_branch
              %354 = sbr.rel (0) target = $region48
            $region47: #{tpu_custom_call.1} parent=43 // pred_region
              // Predicated region
              $region67: #{tpu_custom_call.1} parent=47 // pred_check
                _
              $region68: #{tpu_custom_call.1} parent=47 // pred_check_branch
                %408 = sbr.rel (0) target = $region70
              $region69: #{tpu_custom_call.1} parent=47 // pred_region
                %s409 = sdiv.u32.pop %s345, 3
                %s410 = srem.u32.pop %s345, 3
                // While loop
                $region71: #{tpu_custom_call.1} parent=69 // loop_pre_header
                  _
                $region72: #{tpu_custom_call.1} parent=69 // loop_header
                  %s412 = sphi 0, %s414
                  %p413 = scmp.ge.s32.totalorder %s412, %s409
                  %s417 = sphi 0, %s428
                  %s418 = sphi %s338, %s431
                  %s419 = sphi %s349, %s432
                $region73: #{tpu_custom_call.1} parent=69 // loop_header_branch
                  %416 = sbr.rel (%p413) target = $region77
                $region74: #{tpu_custom_call.1} parent=69 // loop_body
                  %v420 = vld [vmem:[%s418] sm:$0xff]
                  %421 = vst [vmem:[%s419] sm:$0xff] %v420
                  %v422 = vld [vmem:[%s418 + $0x8] sm:$0xff]
                  %423 = vst [vmem:[%s419 + $0x8] sm:$0xff] %v422
                  %v424 = vld [vmem:[%s418 + $0x10] sm:$0xff]
                  %425 = vst [vmem:[%s419 + $0x10] sm:$0xff] %v424
                  %s426 = sadd.s32 1, %s417
                  %p427 = scmp.ge.s32.totalorder %s426, %s409
                  %s428 = scalar_select %p427, 0, %s426
                  %s429 = smul.u32 %s428, 24
                  %s430 = smul.u32 %s428, 24
                  %s431 = scalar_lea.vmem %s338, %s429 [#allocation3]
                  %s432 = scalar_lea.vmem %s349, %s430
                $region75: #{tpu_custom_call.1} parent=69 // loop_footer
                  %s414 = sadd.s32 %s412, 1
                $region76: #{tpu_custom_call.1} parent=69 // loop_footer_branch
                  %411 = sbr.rel target = $region72
                $region77: #{tpu_custom_call.1} parent=69 // loop_exit
                  _
                %s433 = sdiv.u32.pop %s345, 3
                %s434 = srem.u32.pop %s345, 3
                %s435 = smul.u32 %s433, 3
                %s436 = smul.u32 8, %s435
                %s437 = scalar_lea.vmem %s338, %s436 [#allocation3]
                %s438 = smul.u32 8, %s435
                %s439 = scalar_lea.vmem %s349, %s438
                // While loop
                $region78: #{tpu_custom_call.1} parent=69 // loop_pre_header
                  _
                $region79: #{tpu_custom_call.1} parent=69 // loop_header
                  %s441 = sphi 0, %s443
                  %p442 = scmp.ge.s32.totalorder %s441, %s434
                  %s446 = sphi 0, %s453
                  %s447 = sphi %s437, %s456
                  %s448 = sphi %s439, %s457
                $region80: #{tpu_custom_call.1} parent=69 // loop_header_branch
                  %445 = sbr.rel (%p442) target = $region84
                $region81: #{tpu_custom_call.1} parent=69 // loop_body
                  %v449 = vld [vmem:[%s447] sm:$0xff]
                  %450 = vst [vmem:[%s448] sm:$0xff] %v449
                  %s451 = sadd.s32 1, %s446
                  %p452 = scmp.ge.s32.totalorder %s451, %s434
                  %s453 = scalar_select %p452, 0, %s451
                  %s454 = smul.u32 %s453, 8
                  %s455 = smul.u32 %s453, 8
                  %s456 = scalar_lea.vmem %s437, %s454 [#allocation3]
                  %s457 = scalar_lea.vmem %s439, %s455
                $region82: #{tpu_custom_call.1} parent=69 // loop_footer
                  %s443 = sadd.s32 %s441, 1
                $region83: #{tpu_custom_call.1} parent=69 // loop_footer_branch
                  %440 = sbr.rel target = $region79
                $region84: #{tpu_custom_call.1} parent=69 // loop_exit
                  _
              $region70: #{tpu_custom_call.1} parent=47 // pred_fallthru
                _
              // Predicated region
              $region85: #{tpu_custom_call.1} parent=47 // pred_check
                _
              $region86: #{tpu_custom_call.1} parent=47 // pred_check_branch
                %459 = sbr.rel target = $region88
              $region87: #{tpu_custom_call.1} parent=47 // pred_region
                _
              $region88: #{tpu_custom_call.1} parent=47 // pred_fallthru
                _
            $region48: #{tpu_custom_call.1} parent=43 // pred_fallthru
              _
            // Predicated region
            $region49: #{tpu_custom_call.1} parent=43 // pred_check
              _
            $region50: #{tpu_custom_call.1} parent=43 // pred_check_branch
              %356 = sbr.rel target = $region52
            $region51: #{tpu_custom_call.1} parent=43 // pred_region
              %s358 = sdiv.u32.pop %s345, 3
              %s359 = srem.u32.pop %s345, 3
              // While loop
              $region53: #{tpu_custom_call.1} parent=51 // loop_pre_header
                _
              $region54: #{tpu_custom_call.1} parent=51 // loop_header
                %s361 = sphi 0, %s363
                %p362 = scmp.ge.s32.totalorder %s361, %s358
                %s366 = sphi 0, %s377
                %s367 = sphi %s338, %s380
                %s368 = sphi %s349, %s381
              $region55: #{tpu_custom_call.1} parent=51 // loop_header_branch
                %365 = sbr.rel (%p362) target = $region59
              $region56: #{tpu_custom_call.1} parent=51 // loop_body
                %v369 = vld [vmem:[%s367] sm:$0xff]
                %370 = vst [vmem:[%s368] sm:$0xff] %v369
                %v371 = vld [vmem:[%s367 + $0x8] sm:$0xff]
                %372 = vst [vmem:[%s368 + $0x8] sm:$0xff] %v371
                %v373 = vld [vmem:[%s367 + $0x10] sm:$0xff]
                %374 = vst [vmem:[%s368 + $0x10] sm:$0xff] %v373
                %s375 = sadd.s32 1, %s366
                %p376 = scmp.ge.s32.totalorder %s375, %s358
                %s377 = scalar_select %p376, 0, %s375
                %s378 = smul.u32 %s377, 24
                %s379 = smul.u32 %s377, 24
                %s380 = scalar_lea.vmem %s338, %s378 [#allocation3]
                %s381 = scalar_lea.vmem %s349, %s379
              $region57: #{tpu_custom_call.1} parent=51 // loop_footer
                %s363 = sadd.s32 %s361, 1
              $region58: #{tpu_custom_call.1} parent=51 // loop_footer_branch
                %360 = sbr.rel target = $region54
              $region59: #{tpu_custom_call.1} parent=51 // loop_exit
                _
              %s382 = sdiv.u32.pop %s345, 3
              %s383 = srem.u32.pop %s345, 3
              %s384 = smul.u32 %s382, 3
              %s385 = smul.u32 8, %s384
              %s386 = scalar_lea.vmem %s338, %s385 [#allocation3]
              %s387 = smul.u32 8, %s384
              %s388 = scalar_lea.vmem %s349, %s387
              // While loop
              $region60: #{tpu_custom_call.1} parent=51 // loop_pre_header
                _
              $region61: #{tpu_custom_call.1} parent=51 // loop_header
                %s390 = sphi 0, %s392
                %p391 = scmp.ge.s32.totalorder %s390, %s383
                %s395 = sphi 0, %s402
                %s396 = sphi %s386, %s405
                %s397 = sphi %s388, %s406
              $region62: #{tpu_custom_call.1} parent=51 // loop_header_branch
                %394 = sbr.rel (%p391) target = $region66
              $region63: #{tpu_custom_call.1} parent=51 // loop_body
                %v398 = vld [vmem:[%s396] sm:$0xff]
                %399 = vst [vmem:[%s397] sm:$0xff] %v398
                %s400 = sadd.s32 1, %s395
                %p401 = scmp.ge.s32.totalorder %s400, %s383
                %s402 = scalar_select %p401, 0, %s400
                %s403 = smul.u32 %s402, 8
                %s404 = smul.u32 %s402, 8
                %s405 = scalar_lea.vmem %s386, %s403 [#allocation3]
                %s406 = scalar_lea.vmem %s388, %s404
              $region64: #{tpu_custom_call.1} parent=51 // loop_footer
                %s392 = sadd.s32 %s390, 1
              $region65: #{tpu_custom_call.1} parent=51 // loop_footer_branch
                %389 = sbr.rel target = $region61
              $region66: #{tpu_custom_call.1} parent=51 // loop_exit
                _
            $region52: #{tpu_custom_call.1} parent=43 // pred_fallthru
              _
          $region44: #{tpu_custom_call.1} parent=39 // pred_fallthru
            _
          %460 = vnop
        $region40: #{tpu_custom_call.1} parent=35 // pred_fallthru
          _
      $region36: #{tpu_custom_call.1} parent=5 // pred_fallthru
        _
      %p461 = scmp.le.s32.totalorder 2, %s11
      // Predicated region
      $region89: #{tpu_custom_call.1} parent=5 // pred_check
        %p462 = pneg %p461
      $region90: #{tpu_custom_call.1} parent=5 // pred_check_branch
        %464 = sbr.rel (%p462) target = $region92
      $region91: #{tpu_custom_call.1} parent=5 // pred_region
        %s465 = ssub.s32 %s11, 2
        // Predicated region
        $region93: #{tpu_custom_call.1} parent=91 // pred_check
          %p466 = pneg %p129
        $region94: #{tpu_custom_call.1} parent=91 // pred_check_branch
          %468 = sbr.rel (%p466) target = $region96
        $region95: #{tpu_custom_call.1} parent=91 // pred_region
          %s469 = sand.u32 %s114, 1
          %s470 = sand.u32 %s114, 1
          %s471 = smul.addr %s470, 24
          %s472 = scalar_lea.vmem [#allocation3], %s471
        $region96: #{tpu_custom_call.1} parent=91 // pred_fallthru
          _
      $region92: #{tpu_custom_call.1} parent=5 // pred_fallthru
        _
    $region6: #{tpu_custom_call.1} parent=1 // loop_footer
      %s15 = sadd.s32 1, %s11
    $region7: #{tpu_custom_call.1} parent=1 // loop_footer_branch
      %10 = sbr.rel target = $region3
    $region8: #{tpu_custom_call.1} parent=1 // loop_exit
      _

</llo_original>
